<compile_context>
chip_gen: v6e
topology: v6e:2x2x1
jax: 0.10.0
libtpu: 0.0.40
codegen_flags: <defaults>
</compile_context>

<pallas_src>
import functools

import jax
import jax.numpy as jnp
import numpy as np
from jax import lax
from jax.experimental import pallas as pl
from jax.experimental.pallas import tpu as pltpu

BN_EPS = 1e-5


# ----------------------------------------------------------------------------
# Wrapper-side parameter preprocessing (tiny, one-time, outside the kernel).
# ----------------------------------------------------------------------------
def _reflect1(p, n):
    if p < 0:
        return -p
    if p >= n:
        return 2 * n - 2 - p
    return p


def _build_w_bands(w_hwio, width):
    """w_hwio (3,3,Cin,Cout) -> (3, W*Cin, W*Cout) per-dy banded matrices.

    band[dy][p*Cin+ci, wo*Cout+co] = sum_dx w[dy,dx,ci,co] * [reflect(wo-1+dx)==p]
    i.e. the W-direction conv taps AND the W-direction ReflectionPad2d(1) are
    folded into a dense lane->lane matrix (one per vertical tap dy).
    """
    kh, kw, cin, cout = w_hwio.shape
    tap = np.zeros((kw, width, width), np.float32)          # tap[dx, wo, p]
    for dx in range(kw):
        for wo in range(width):
            tap[dx, wo, _reflect1(wo - 1 + dx, width)] += 1.0
    bands = jnp.einsum("ydio,dwp->ypiwo", w_hwio.astype(jnp.float32),
                       jnp.asarray(tap), precision=lax.Precision.HIGHEST)
    return bands.reshape(kh, width * cin, width * cout)


def _build_bigband(w_hwio, width, cin):
    """(3,3,C,C) -> (4L, 2L) K-stacked band for the 2-rows-per-lane-row layout.

    LHS K-lane layout :  [ row 2r | row 2r+1 | row 2r-1 | row 2r+2 ]
    output lane layout:  [ out row 2r | out row 2r+1 ]
    so one matmul produces both packed output rows with all 9 taps.
    """
    L = width * cin
    band = _build_w_bands(w_hwio, width)          # (3, L, L); dy = 0(up),1(mid),2(down)
    bb = jnp.zeros((4 * L, 2 * L), jnp.float32)
    bb = bb.at[0 * L:1 * L, 0:L].set(band[1])         # row 2r   -> out 2r   (dy=1)
    bb = bb.at[0 * L:1 * L, L:2 * L].set(band[0])     # row 2r   -> out 2r+1 (dy=0)
    bb = bb.at[1 * L:2 * L, 0:L].set(band[2])         # row 2r+1 -> out 2r   (dy=2)
    bb = bb.at[1 * L:2 * L, L:2 * L].set(band[1])     # row 2r+1 -> out 2r+1 (dy=1)
    bb = bb.at[2 * L:3 * L, 0:L].set(band[0])         # row 2r-1 -> out 2r   (dy=0)
    bb = bb.at[3 * L:4 * L, L:2 * L].set(band[2])     # row 2r+2 -> out 2r+1 (dy=2)
    return bb


# ----------------------------------------------------------------------------
# Fused Pallas kernel: pad -> conv -> BN -> ReLU, twice, + residual.
# ----------------------------------------------------------------------------
def _resnet_block_kernel(x_ref, bb1_ref, bb2_ref, g1_ref, be1_ref,
                         g2_ref, be2_ref, pmat_ref, o_ref, lhs_ref, *,
                         N, R, L, C):
    L2 = 2 * L                      # packed lane width (= 128 for the test shape)
    M = N * R                       # matmul rows
    inv_m = jnp.float32(1.0 / (M * (L2 // C)))       # == 1 / (N*H*W)
    pmat = pmat_ref[...]                             # (L2, L2) lane-channel match

    def build_lhs(p):
        # p: (N, R, L2).  K-lanes: [row 2r | row 2r+1 | row 2r-1 | row 2r+2],
        # with ReflectionPad2d(1) handled at the H boundaries.
        lhs_ref[:, :, 0:L2] = p                                  # aligned 128-lane store
        lhs_ref[:, 1:R, L2:L2 + L] = p[:, 0:R - 1, L:L2]         # row 2r-1
        lhs_ref[:, 0:1, L2:L2 + L] = p[:, 0:1, L:L2]             #   reflect: row(-1)=row 1
        lhs_ref[:, 0:R - 1, L2 + L:2 * L2] = p[:, 1:R, 0:L]      # row 2r+2
        lhs_ref[:, R - 1:R, L2 + L:2 * L2] = p[:, R - 1:R, 0:L]  #   reflect: row(H)=row(H-2)

    def conv_bn_relu(p, bb_ref, gamma_l, beta_l):
        build_lhs(p)
        # Single K-stacked MXU matmul: (M, 4L) x (4L, 2L) -> (M, 2L).
        acc = jnp.dot(lhs_ref[...].reshape(M, 2 * L2), bb_ref[...],
                      preferred_element_type=jnp.float32)
        # NOTE: the conv bias is intentionally omitted -- it is exactly
        # cancelled by the training-mode BN mean subtraction.

        # Single-pass BN statistics; ONE tiny matmul broadcasts per-channel
        # sums / sum-of-squares back onto every lane.
        col_s = jnp.sum(acc, axis=0, keepdims=True)              # (1, L2)
        col_ss = jnp.sum(acc * acc, axis=0, keepdims=True)       # (1, L2)
        red = jnp.dot(jnp.concatenate([col_s, col_ss], axis=0), pmat,
                      preferred_element_type=jnp.float32)        # (2, L2)
        mean_l = red[0:1] * inv_m
        var_l = red[1:2] * inv_m - mean_l * mean_l               # biased var (training BN)
        scale_l = gamma_l * lax.rsqrt(var_l + BN_EPS)            # EUP rsqrt
        shift_l = beta_l - mean_l * scale_l
        y = jnp.maximum(acc * scale_l + shift_l, 0.0)            # one FMA + ReLU
        return y.reshape(N, R, L2)

    x = x_ref[...].astype(jnp.float32)                           # (N, R, L2)
    h1 = conv_bn_relu(x, bb1_ref, g1_ref[...], be1_ref[...])
    h2 = conv_bn_relu(h1, bb2_ref, g2_ref[...], be2_ref[...])
    o_ref[...] = (x + h2).astype(o_ref.dtype)                    # residual add


def _full_spec(shape):
    zeros = (0,) * len(shape)
    return pl.BlockSpec(shape, lambda i: zeros)


def resnet_block_forward(x_nchw, params):
    """Fused Pallas implementation of ResNet_Block.forward. x_nchw: (N, C, H, W)."""
    w1, b1, g1, be1, w2, b2, g2, be2 = params
    del b1, b2   # conv biases are a mathematical no-op under training-mode BN
    N, C, H, W = x_nchw.shape
    assert H % 2 == 0, "2-rows-per-lane-row packing requires even H"
    R = H // 2
    L = W * C
    L2 = 2 * L

    # Boundary layout glue (free row-major reshapes): NCHW -> NHWC -> packed
    # (N, H/2, 2*W*C) lane-dense slab.
    x_packed = jnp.transpose(x_nchw, (0, 2, 3, 1)).reshape(N, R, L2)

    bb1 = _build_bigband(w1, W, C)               # (4L, 2L) = (256, 128)
    bb2 = _build_bigband(w2, W, C)
    # Lane -> channel match matrix: red = stats @ pmat broadcasts per-channel
    # sums back to every lane in one dot.
    lane_ch = jnp.arange(L2, dtype=jnp.int32) % C
    pmat = (lane_ch[:, None] == lane_ch[None, :]).astype(jnp.float32)   # (L2, L2)
    reps = L2 // C
    g1_l = jnp.tile(g1.reshape(1, C), (1, reps))
    be1_l = jnp.tile(be1.reshape(1, C), (1, reps))
    g2_l = jnp.tile(g2.reshape(1, C), (1, reps))
    be2_l = jnp.tile(be2.reshape(1, C), (1, reps))

    inputs = (x_packed, bb1, bb2, g1_l, be1_l, g2_l, be2_l, pmat)

    flops = int(2 * (2 * (N * R) * (4 * L) * L2)     # two K-stacked conv matmuls
                + 2 * (2 * 2 * L2 * L2))             # two BN-stats matmuls
    bytes_accessed = int(4 * (x_packed.size + bb1.size + bb2.size + pmat.size
                              + 4 * L2 + N * R * L2))

    out_packed = pl.pallas_call(
        functools.partial(_resnet_block_kernel, N=N, R=R, L=L, C=C),
        grid=(1,),
        in_specs=[_full_spec(a.shape) for a in inputs],
        out_specs=_full_spec((N, R, L2)),
        out_shape=jax.ShapeDtypeStruct((N, R, L2), x_nchw.dtype),
        scratch_shapes=[pltpu.VMEM((N, R, 4 * L), jnp.float32)],   # K-stacked LHS
        compiler_params=pltpu.CompilerParams(
            dimension_semantics=("arbitrary",),
            vmem_limit_bytes=16 * 1024 * 1024),
        cost_estimate=pl.CostEstimate(flops=flops, transcendentals=2 * L2,
                                      bytes_accessed=bytes_accessed),
    )(*inputs)

    # (N, H/2, 2*W*C) -> NCHW (free reshape + one transpose, boundary glue).
    return jnp.transpose(out_packed.reshape(N, H, W, C), (0, 3, 1, 2))


# ----------------------------------------------------------------------------
# Pure-JAX reference (same semantics as the PyTorch module, training-mode BN).
# ----------------------------------------------------------------------------
def ref_forward(x_nchw, params):
    w1, b1, g1, be1, w2, b2, g2, be2 = params
    x = jnp.transpose(x_nchw, (0, 2, 3, 1)).astype(jnp.float32)

    def pad(t):
        return jnp.pad(t, ((0, 0), (1, 1), (1, 1), (0, 0)), mode="reflect")

    def conv(xp, w, b):
        y = lax.conv_general_dilated(
            xp, w, (1, 1), "VALID",
            dimension_numbers=("NHWC", "HWIO", "NHWC"),
            precision=lax.Precision.HIGHEST)
        return y + b.reshape(1, 1, 1, -1)

    def bn_relu(t, g, be):
        mean = jnp.mean(t, axis=(0, 1, 2), keepdims=True)
        var = jnp.mean((t - mean) ** 2, axis=(0, 1, 2), keepdims=True)
        y = (g.reshape(1, 1, 1, -1) * (t - mean) * lax.rsqrt(var + BN_EPS)
             + be.reshape(1, 1, 1, -1))
        return jnp.maximum(y, 0.0)

    h = bn_relu(conv(pad(x), w1, b1), g1, be1)
    out = x + bn_relu(conv(pad(h), w2, b2), g2, be2)
    return jnp.transpose(out, (0, 3, 1, 2))


if __name__ == "__main__":
    # Small deterministic problem: in_channels = out_channels = 4 (the module's
    # residual add requires equal channels), batch = 2, spatial 16x16.
    N, C, H, W = 2, 4, 16, 16
    key = jax.random.PRNGKey(0)
    (k_x, k_w1, k_b1, k_w2, k_b2,
     k_g1, k_be1, k_g2, k_be2) = jax.random.split(key, 9)

    x = jax.random.normal(k_x, (N, C, H, W), dtype=jnp.float32)

    fan_in = C * 3 * 3
    bound = 1.0 / float(np.sqrt(fan_in))
    # Conv weights directly in HWIO layout (= PyTorch OIHW transposed).
    w1 = jax.random.uniform(k_w1, (3, 3, C, C), jnp.float32, -bound, bound)
    b1 = jax.random.uniform(k_b1, (1, C), jnp.float32, -bound, bound)
    w2 = jax.random.uniform(k_w2, (3, 3, C, C), jnp.float32, -bound, bound)
    b2 = jax.random.uniform(k_b2, (1, C), jnp.float32, -bound, bound)
    # Non-trivial BatchNorm affine params to exercise the scale/shift path.
    g1 = jax.random.uniform(k_g1, (1, C), jnp.float32, 0.5, 1.5)
    be1 = jax.random.uniform(k_be1, (1, C), jnp.float32, -0.5, 0.5)
    g2 = jax.random.uniform(k_g2, (1, C), jnp.float32, 0.5, 1.5)
    be2 = jax.random.uniform(k_be2, (1, C), jnp.float32, -0.5, 0.5)
    params = (w1, b1, g1, be1, w2, b2, g2, be2)

    fwd = jax.jit(resnet_block_forward)
    out = jax.block_until_ready(fwd(x, params))
    ref = jax.block_until_ready(ref_forward(x, params))

    assert out.shape == (N, C, H, W)
    np.testing.assert_allclose(np.asarray(out), np.asarray(ref),
                               atol=5e-3, rtol=5e-3)
    print("KERNEL_OK")
</pallas_src>

<mosaic_0001>
module attributes {stable_mosaic.version = 11 : i64} {
  func.func @_resnet_block_kernel(%arg0: i32, %arg1: memref<2x8x128xf32, #tpu.memory_space<vmem>>, %arg2: memref<256x128xf32, #tpu.memory_space<vmem>>, %arg3: memref<256x128xf32, #tpu.memory_space<vmem>>, %arg4: memref<1x128xf32, #tpu.memory_space<vmem>>, %arg5: memref<1x128xf32, #tpu.memory_space<vmem>>, %arg6: memref<1x128xf32, #tpu.memory_space<vmem>>, %arg7: memref<1x128xf32, #tpu.memory_space<vmem>>, %arg8: memref<128x128xf32, #tpu.memory_space<vmem>>, %arg9: memref<2x8x128xf32, #tpu.memory_space<vmem>>, %arg10: memref<2x8x256xf32, #tpu.memory_space<vmem>>) attributes {dimension_semantics = [#tpu.dimension_semantics<arbitrary>], iteration_bounds = array<i64: 1>, scalar_prefetch = 0 : i64, scratch_operands = 1 : i64, tpu.core_type = #tpu.core_type<tc>, window_params = [{pipeline_mode = #tpu.pipeline_mode<synchronous>, transform_indices = @transform_0, window_bounds = array<i64: 2, 8, 128>}, {pipeline_mode = #tpu.pipeline_mode<synchronous>, transform_indices = @transform_1, window_bounds = array<i64: 256, 128>}, {pipeline_mode = #tpu.pipeline_mode<synchronous>, transform_indices = @transform_2, window_bounds = array<i64: 256, 128>}, {pipeline_mode = #tpu.pipeline_mode<synchronous>, transform_indices = @transform_3, window_bounds = array<i64: 1, 128>}, {pipeline_mode = #tpu.pipeline_mode<synchronous>, transform_indices = @transform_4, window_bounds = array<i64: 1, 128>}, {pipeline_mode = #tpu.pipeline_mode<synchronous>, transform_indices = @transform_5, window_bounds = array<i64: 1, 128>}, {pipeline_mode = #tpu.pipeline_mode<synchronous>, transform_indices = @transform_6, window_bounds = array<i64: 1, 128>}, {pipeline_mode = #tpu.pipeline_mode<synchronous>, transform_indices = @transform_7, window_bounds = array<i64: 128, 128>}, {pipeline_mode = #tpu.pipeline_mode<synchronous>, transform_indices = @transform_8, window_bounds = array<i64: 2, 8, 128>}]} {
    %c0 = arith.constant 0 : index
    %c0_0 = arith.constant 0 : index
    %0 = vector.load %arg8[%c0, %c0_0] : memref<128x128xf32, #tpu.memory_space<vmem>>, vector<128x128xf32>
    %c0_1 = arith.constant 0 : index
    %c0_2 = arith.constant 0 : index
    %c0_3 = arith.constant 0 : index
    %1 = vector.load %arg1[%c0_1, %c0_2, %c0_3] : memref<2x8x128xf32, #tpu.memory_space<vmem>>, vector<2x8x128xf32>
    %c0_4 = arith.constant 0 : index
    %c0_5 = arith.constant 0 : index
    %2 = vector.load %arg4[%c0_4, %c0_5] : memref<1x128xf32, #tpu.memory_space<vmem>>, vector<1x128xf32>
    %c0_6 = arith.constant 0 : index
    %c0_7 = arith.constant 0 : index
    %3 = vector.load %arg5[%c0_6, %c0_7] : memref<1x128xf32, #tpu.memory_space<vmem>>, vector<1x128xf32>
    %c0_8 = arith.constant 0 : index
    %c0_9 = arith.constant 0 : index
    %c0_10 = arith.constant 0 : index
    %4 = vector.load %arg10[%c0_8, %c0_9, %c0_10] : memref<2x8x256xf32, #tpu.memory_space<vmem>>, vector<2x8x128xf32>
    tpu.vector_store %arg10[%c0_8, %c0_9, %c0_10], %1 {strides = array<i32>} : memref<2x8x256xf32, #tpu.memory_space<vmem>>, vector<2x8x128xf32>,
    %5 = vector.extract_strided_slice %1 {offsets = [0, 0, 64], sizes = [2, 7, 64], strides = [1, 1, 1]} : vector<2x8x128xf32> to vector<2x7x64xf32>
    %c0_11 = arith.constant 0 : index
    %c1 = arith.constant 1 : index
    %c128 = arith.constant 128 : index
    %6 = vector.load %arg10[%c0_11, %c1, %c128] : memref<2x8x256xf32, #tpu.memory_space<vmem>>, vector<2x7x64xf32>
    tpu.vector_store %arg10[%c0_11, %c1, %c128], %5 {strides = array<i32>} : memref<2x8x256xf32, #tpu.memory_space<vmem>>, vector<2x7x64xf32>,
    %7 = vector.extract_strided_slice %1 {offsets = [0, 0, 64], sizes = [2, 1, 64], strides = [1, 1, 1]} : vector<2x8x128xf32> to vector<2x1x64xf32>
    %c0_12 = arith.constant 0 : index
    %c0_13 = arith.constant 0 : index
    %c128_14 = arith.constant 128 : index
    %8 = vector.load %arg10[%c0_12, %c0_13, %c128_14] : memref<2x8x256xf32, #tpu.memory_space<vmem>>, vector<2x1x64xf32>
    tpu.vector_store %arg10[%c0_12, %c0_13, %c128_14], %7 {strides = array<i32>} : memref<2x8x256xf32, #tpu.memory_space<vmem>>, vector<2x1x64xf32>,
    %9 = vector.extract_strided_slice %1 {offsets = [0, 1, 0], sizes = [2, 7, 64], strides = [1, 1, 1]} : vector<2x8x128xf32> to vector<2x7x64xf32>
    %c0_15 = arith.constant 0 : index
    %c0_16 = arith.constant 0 : index
    %c192 = arith.constant 192 : index
    %10 = vector.load %arg10[%c0_15, %c0_16, %c192] : memref<2x8x256xf32, #tpu.memory_space<vmem>>, vector<2x7x64xf32>
    tpu.vector_store %arg10[%c0_15, %c0_16, %c192], %9 {strides = array<i32>} : memref<2x8x256xf32, #tpu.memory_space<vmem>>, vector<2x7x64xf32>,
    %11 = vector.extract_strided_slice %1 {offsets = [0, 7, 0], sizes = [2, 1, 64], strides = [1, 1, 1]} : vector<2x8x128xf32> to vector<2x1x64xf32>
    %c0_17 = arith.constant 0 : index
    %c7 = arith.constant 7 : index
    %c192_18 = arith.constant 192 : index
    %12 = vector.load %arg10[%c0_17, %c7, %c192_18] : memref<2x8x256xf32, #tpu.memory_space<vmem>>, vector<2x1x64xf32>
    tpu.vector_store %arg10[%c0_17, %c7, %c192_18], %11 {strides = array<i32>} : memref<2x8x256xf32, #tpu.memory_space<vmem>>, vector<2x1x64xf32>,
    %c0_19 = arith.constant 0 : index
    %c0_20 = arith.constant 0 : index
    %c0_21 = arith.constant 0 : index
    %13 = vector.load %arg10[%c0_19, %c0_20, %c0_21] : memref<2x8x256xf32, #tpu.memory_space<vmem>>, vector<2x8x256xf32>
    %14 = vector.shape_cast %13 : vector<2x8x256xf32> to vector<16x256xf32>
    %c0_22 = arith.constant 0 : index
    %c0_23 = arith.constant 0 : index
    %15 = vector.load %arg2[%c0_22, %c0_23] : memref<256x128xf32, #tpu.memory_space<vmem>>, vector<256x128xf32>
    %cst = arith.constant dense<0.000000e+00> : vector<16x128xf32>
    %16 = tpu.matmul %14, %15, %cst {dimension_numbers = #tpu.dot_dimension_numbers<[1], [0], [0], [1], [0, 0, 1, 1], [], []>} : vector<16x256xf32>, vector<256x128xf32>, vector<16x128xf32> -> vector<16x128xf32>
    %cst_24 = arith.constant dense<0.000000e+00> : vector<128xf32>
    %17 = vector.multi_reduction <add>, %16, %cst_24 [0] : vector<16x128xf32> to vector<128xf32>
    %18 = vector.shape_cast %17 : vector<128xf32> to vector<1x128xf32>
    %19 = arith.mulf %16, %16 : vector<16x128xf32>
    %cst_25 = arith.constant dense<0.000000e+00> : vector<128xf32>
    %20 = vector.multi_reduction <add>, %19, %cst_25 [0] : vector<16x128xf32> to vector<128xf32>
    %21 = vector.shape_cast %20 : vector<128xf32> to vector<1x128xf32>
    %22 = tpu.concatenate %18, %21 in 0 : vector<1x128xf32>, vector<1x128xf32> -> vector<2x128xf32>
    %cst_26 = arith.constant dense<0.000000e+00> : vector<2x128xf32>
    %23 = tpu.matmul %22, %0, %cst_26 {dimension_numbers = #tpu.dot_dimension_numbers<[1], [0], [0], [1], [0, 0, 1, 1], [], []>} : vector<2x128xf32>, vector<128x128xf32>, vector<2x128xf32> -> vector<2x128xf32>
    %24 = vector.extract_strided_slice %23 {offsets = [0, 0], sizes = [1, 128], strides = [1, 1]} : vector<2x128xf32> to vector<1x128xf32>
    %cst_27 = arith.constant 0.001953125 : f32
    %25 = vector.broadcast %cst_27 : f32 to vector<1x128xf32>
    %26 = arith.mulf %24, %25 : vector<1x128xf32>
    %27 = vector.extract_strided_slice %23 {offsets = [1, 0], sizes = [1, 128], strides = [1, 1]} : vector<2x128xf32> to vector<1x128xf32>
    %cst_28 = arith.constant 0.001953125 : f32
    %28 = vector.broadcast %cst_28 : f32 to vector<1x128xf32>
    %29 = arith.mulf %27, %28 : vector<1x128xf32>
    %30 = arith.mulf %26, %26 : vector<1x128xf32>
    %31 = arith.subf %29, %30 : vector<1x128xf32>
    %cst_29 = arith.constant 9.99999974E-6 : f32
    %32 = vector.broadcast %cst_29 : f32 to vector<1x128xf32>
    %33 = arith.addf %31, %32 : vector<1x128xf32>
    %34 = math.rsqrt %33 : vector<1x128xf32>
    %35 = arith.mulf %2, %34 : vector<1x128xf32>
    %36 = arith.mulf %26, %35 : vector<1x128xf32>
    %37 = arith.subf %3, %36 : vector<1x128xf32>
    %38 = vector.broadcast %35 : vector<1x128xf32> to vector<16x128xf32>
    %39 = arith.mulf %16, %38 : vector<16x128xf32>
    %40 = vector.broadcast %37 : vector<1x128xf32> to vector<16x128xf32>
    %41 = arith.addf %39, %40 : vector<16x128xf32>
    %cst_30 = arith.constant 0.000000e+00 : f32
    %42 = vector.broadcast %cst_30 : f32 to vector<16x128xf32>
    %43 = arith.maximumf %41, %42 : vector<16x128xf32>
    %44 = vector.shape_cast %43 : vector<16x128xf32> to vector<2x8x128xf32>
    %c0_31 = arith.constant 0 : index
    %c0_32 = arith.constant 0 : index
    %45 = vector.load %arg6[%c0_31, %c0_32] : memref<1x128xf32, #tpu.memory_space<vmem>>, vector<1x128xf32>
    %c0_33 = arith.constant 0 : index
    %c0_34 = arith.constant 0 : index
    %46 = vector.load %arg7[%c0_33, %c0_34] : memref<1x128xf32, #tpu.memory_space<vmem>>, vector<1x128xf32>
    %c0_35 = arith.constant 0 : index
    %c0_36 = arith.constant 0 : index
    %c0_37 = arith.constant 0 : index
    %47 = vector.load %arg10[%c0_35, %c0_36, %c0_37] : memref<2x8x256xf32, #tpu.memory_space<vmem>>, vector<2x8x128xf32>
    tpu.vector_store %arg10[%c0_35, %c0_36, %c0_37], %44 {strides = array<i32>} : memref<2x8x256xf32, #tpu.memory_space<vmem>>, vector<2x8x128xf32>,
    %48 = vector.extract_strided_slice %44 {offsets = [0, 0, 64], sizes = [2, 7, 64], strides = [1, 1, 1]} : vector<2x8x128xf32> to vector<2x7x64xf32>
    %c0_38 = arith.constant 0 : index
    %c1_39 = arith.constant 1 : index
    %c128_40 = arith.constant 128 : index
    %49 = vector.load %arg10[%c0_38, %c1_39, %c128_40] : memref<2x8x256xf32, #tpu.memory_space<vmem>>, vector<2x7x64xf32>
    tpu.vector_store %arg10[%c0_38, %c1_39, %c128_40], %48 {strides = array<i32>} : memref<2x8x256xf32, #tpu.memory_space<vmem>>, vector<2x7x64xf32>,
    %50 = vector.extract_strided_slice %44 {offsets = [0, 0, 64], sizes = [2, 1, 64], strides = [1, 1, 1]} : vector<2x8x128xf32> to vector<2x1x64xf32>
    %c0_41 = arith.constant 0 : index
    %c0_42 = arith.constant 0 : index
    %c128_43 = arith.constant 128 : index
    %51 = vector.load %arg10[%c0_41, %c0_42, %c128_43] : memref<2x8x256xf32, #tpu.memory_space<vmem>>, vector<2x1x64xf32>
    tpu.vector_store %arg10[%c0_41, %c0_42, %c128_43], %50 {strides = array<i32>} : memref<2x8x256xf32, #tpu.memory_space<vmem>>, vector<2x1x64xf32>,
    %52 = vector.extract_strided_slice %44 {offsets = [0, 1, 0], sizes = [2, 7, 64], strides = [1, 1, 1]} : vector<2x8x128xf32> to vector<2x7x64xf32>
    %c0_44 = arith.constant 0 : index
    %c0_45 = arith.constant 0 : index
    %c192_46 = arith.constant 192 : index
    %53 = vector.load %arg10[%c0_44, %c0_45, %c192_46] : memref<2x8x256xf32, #tpu.memory_space<vmem>>, vector<2x7x64xf32>
    tpu.vector_store %arg10[%c0_44, %c0_45, %c192_46], %52 {strides = array<i32>} : memref<2x8x256xf32, #tpu.memory_space<vmem>>, vector<2x7x64xf32>,
    %54 = vector.extract_strided_slice %44 {offsets = [0, 7, 0], sizes = [2, 1, 64], strides = [1, 1, 1]} : vector<2x8x128xf32> to vector<2x1x64xf32>
    %c0_47 = arith.constant 0 : index
    %c7_48 = arith.constant 7 : index
    %c192_49 = arith.constant 192 : index
    %55 = vector.load %arg10[%c0_47, %c7_48, %c192_49] : memref<2x8x256xf32, #tpu.memory_space<vmem>>, vector<2x1x64xf32>
    tpu.vector_store %arg10[%c0_47, %c7_48, %c192_49], %54 {strides = array<i32>} : memref<2x8x256xf32, #tpu.memory_space<vmem>>, vector<2x1x64xf32>,
    %c0_50 = arith.constant 0 : index
    %c0_51 = arith.constant 0 : index
    %c0_52 = arith.constant 0 : index
    %56 = vector.load %arg10[%c0_50, %c0_51, %c0_52] : memref<2x8x256xf32, #tpu.memory_space<vmem>>, vector<2x8x256xf32>
    %57 = vector.shape_cast %56 : vector<2x8x256xf32> to vector<16x256xf32>
    %c0_53 = arith.constant 0 : index
    %c0_54 = arith.constant 0 : index
    %58 = vector.load %arg3[%c0_53, %c0_54] : memref<256x128xf32, #tpu.memory_space<vmem>>, vector<256x128xf32>
    %cst_55 = arith.constant dense<0.000000e+00> : vector<16x128xf32>
    %59 = tpu.matmul %57, %58, %cst_55 {dimension_numbers = #tpu.dot_dimension_numbers<[1], [0], [0], [1], [0, 0, 1, 1], [], []>} : vector<16x256xf32>, vector<256x128xf32>, vector<16x128xf32> -> vector<16x128xf32>
    %cst_56 = arith.constant dense<0.000000e+00> : vector<128xf32>
    %60 = vector.multi_reduction <add>, %59, %cst_56 [0] : vector<16x128xf32> to vector<128xf32>
    %61 = vector.shape_cast %60 : vector<128xf32> to vector<1x128xf32>
    %62 = arith.mulf %59, %59 : vector<16x128xf32>
    %cst_57 = arith.constant dense<0.000000e+00> : vector<128xf32>
    %63 = vector.multi_reduction <add>, %62, %cst_57 [0] : vector<16x128xf32> to vector<128xf32>
    %64 = vector.shape_cast %63 : vector<128xf32> to vector<1x128xf32>
    %65 = tpu.concatenate %61, %64 in 0 : vector<1x128xf32>, vector<1x128xf32> -> vector<2x128xf32>
    %cst_58 = arith.constant dense<0.000000e+00> : vector<2x128xf32>
    %66 = tpu.matmul %65, %0, %cst_58 {dimension_numbers = #tpu.dot_dimension_numbers<[1], [0], [0], [1], [0, 0, 1, 1], [], []>} : vector<2x128xf32>, vector<128x128xf32>, vector<2x128xf32> -> vector<2x128xf32>
    %67 = vector.extract_strided_slice %66 {offsets = [0, 0], sizes = [1, 128], strides = [1, 1]} : vector<2x128xf32> to vector<1x128xf32>
    %cst_59 = arith.constant 0.001953125 : f32
    %68 = vector.broadcast %cst_59 : f32 to vector<1x128xf32>
    %69 = arith.mulf %67, %68 : vector<1x128xf32>
    %70 = vector.extract_strided_slice %66 {offsets = [1, 0], sizes = [1, 128], strides = [1, 1]} : vector<2x128xf32> to vector<1x128xf32>
    %cst_60 = arith.constant 0.001953125 : f32
    %71 = vector.broadcast %cst_60 : f32 to vector<1x128xf32>
    %72 = arith.mulf %70, %71 : vector<1x128xf32>
    %73 = arith.mulf %69, %69 : vector<1x128xf32>
    %74 = arith.subf %72, %73 : vector<1x128xf32>
    %cst_61 = arith.constant 9.99999974E-6 : f32
    %75 = vector.broadcast %cst_61 : f32 to vector<1x128xf32>
    %76 = arith.addf %74, %75 : vector<1x128xf32>
    %77 = math.rsqrt %76 : vector<1x128xf32>
    %78 = arith.mulf %45, %77 : vector<1x128xf32>
    %79 = arith.mulf %69, %78 : vector<1x128xf32>
    %80 = arith.subf %46, %79 : vector<1x128xf32>
    %81 = vector.broadcast %78 : vector<1x128xf32> to vector<16x128xf32>
    %82 = arith.mulf %59, %81 : vector<16x128xf32>
    %83 = vector.broadcast %80 : vector<1x128xf32> to vector<16x128xf32>
    %84 = arith.addf %82, %83 : vector<16x128xf32>
    %cst_62 = arith.constant 0.000000e+00 : f32
    %85 = vector.broadcast %cst_62 : f32 to vector<16x128xf32>
    %86 = arith.maximumf %84, %85 : vector<16x128xf32>
    %87 = vector.shape_cast %86 : vector<16x128xf32> to vector<2x8x128xf32>
    %88 = arith.addf %1, %87 : vector<2x8x128xf32>
    %c0_63 = arith.constant 0 : index
    %c0_64 = arith.constant 0 : index
    %c0_65 = arith.constant 0 : index
    %89 = vector.load %arg9[%c0_63, %c0_64, %c0_65] : memref<2x8x128xf32, #tpu.memory_space<vmem>>, vector<2x8x128xf32>
    tpu.vector_store %arg9[%c0_63, %c0_64, %c0_65], %88 {strides = array<i32>} : memref<2x8x128xf32, #tpu.memory_space<vmem>>, vector<2x8x128xf32>,
    return
  }
  func.func @transform_0(%arg0: i32) -> (i32, i32, i32) {
    %c0_i32 = arith.constant 0 : i32
    %c0_i32_0 = arith.constant 0 : i32
    %c0_i32_1 = arith.constant 0 : i32
    %c0_i32_2 = arith.constant 0 : i32
    return %c0_i32, %c0_i32_0, %c0_i32_1 : i32, i32, i32
  }
  func.func @transform_1(%arg0: i32) -> (i32, i32) {
    %c0_i32 = arith.constant 0 : i32
    %c0_i32_0 = arith.constant 0 : i32
    %c0_i32_1 = arith.constant 0 : i32
    return %c0_i32, %c0_i32_0 : i32, i32
  }
  func.func @transform_2(%arg0: i32) -> (i32, i32) {
    %c0_i32 = arith.constant 0 : i32
    %c0_i32_0 = arith.constant 0 : i32
    %c0_i32_1 = arith.constant 0 : i32
    return %c0_i32, %c0_i32_0 : i32, i32
  }
  func.func @transform_3(%arg0: i32) -> (i32, i32) {
    %c0_i32 = arith.constant 0 : i32
    %c0_i32_0 = arith.constant 0 : i32
    %c0_i32_1 = arith.constant 0 : i32
    return %c0_i32, %c0_i32_0 : i32, i32
  }
  func.func @transform_4(%arg0: i32) -> (i32, i32) {
    %c0_i32 = arith.constant 0 : i32
    %c0_i32_0 = arith.constant 0 : i32
    %c0_i32_1 = arith.constant 0 : i32
    return %c0_i32, %c0_i32_0 : i32, i32
  }
  func.func @transform_5(%arg0: i32) -> (i32, i32) {
    %c0_i32 = arith.constant 0 : i32
    %c0_i32_0 = arith.constant 0 : i32
    %c0_i32_1 = arith.constant 0 : i32
    return %c0_i32, %c0_i32_0 : i32, i32
  }
  func.func @transform_6(%arg0: i32) -> (i32, i32) {
    %c0_i32 = arith.constant 0 : i32
    %c0_i32_0 = arith.constant 0 : i32
    %c0_i32_1 = arith.constant 0 : i32
    return %c0_i32, %c0_i32_0 : i32, i32
  }
  func.func @transform_7(%arg0: i32) -> (i32, i32) {
    %c0_i32 = arith.constant 0 : i32
    %c0_i32_0 = arith.constant 0 : i32
    %c0_i32_1 = arith.constant 0 : i32
    return %c0_i32, %c0_i32_0 : i32, i32
  }
  func.func @transform_8(%arg0: i32) -> (i32, i32, i32) {
    %c0_i32 = arith.constant 0 : i32
    %c0_i32_0 = arith.constant 0 : i32
    %c0_i32_1 = arith.constant 0 : i32
    %c0_i32_2 = arith.constant 0 : i32
    return %c0_i32, %c0_i32_0, %c0_i32_1 : i32, i32, i32
  }
}

</mosaic_0001>

<llo_original>
// kernel: resnet_block_forward.1
$region0: #{resnet_block_forward.1}
  #allocation0 [shape = 'u32[]', space=smem, size = 0x4, offset = 0x4, fixed_abs, tag = 'smem constant byte address 0x4 - core index']
  #allocation1 [shape = 'u32[144,128]{1,0:T(1,128)}', space=vmem, size = 0x12000, scoped, tag = 'internal scratch']
  #allocation2 [shape = 'f32[2,8,256]{2,1,0:T(8,128)}', space=vmem, size = 0x4000, scoped, tag = 'scratch operand']
  %s0 = inlined_call_operand.vmem [shape: f32[2,8,128], index: 0, kind: input, shape index: {}]
  %s1 = inlined_call_operand.vmem [shape: f32[256,128], index: 1, kind: input, shape index: {}]
  %s2 = inlined_call_operand.vmem [shape: f32[256,128], index: 2, kind: input, shape index: {}]
  %s3 = inlined_call_operand.vmem [shape: f32[1,128], index: 3, kind: input, shape index: {}]
  %s4 = inlined_call_operand.vmem [shape: f32[1,128], index: 4, kind: input, shape index: {}]
  %s5 = inlined_call_operand.vmem [shape: f32[1,128], index: 5, kind: input, shape index: {}]
  %s6 = inlined_call_operand.vmem [shape: f32[1,128], index: 6, kind: input, shape index: {}]
  %s7 = inlined_call_operand.vmem [shape: f32[128,128], index: 7, kind: input, shape index: {}]
  %s8 = inlined_call_operand.vmem [shape: f32[2,8,128], index: 8, kind: output, shape index: {}]
  %s9 = sld [smem:[#allocation0]]
  $region42: #{resnet_block_forward.1} parent=0
    _
  %s11 = ssub.s32 1, %s9
  %s12 = scalar_select 0, %s11, %s9
  // Predicated region
  $region2: #{resnet_block_forward.1} parent=0 // pred_check
    _
  $region3: #{resnet_block_forward.1} parent=0 // pred_check_branch
    %14 = sbr.rel (0) target = $region5
  $region4: #{resnet_block_forward.1} parent=0 // pred_region
    _
  $region5: #{resnet_block_forward.1} parent=0 // pred_fallthru
    _
  // Predicated region
  $region6: #{resnet_block_forward.1} parent=0 // pred_check
    _
  $region7: #{resnet_block_forward.1} parent=0 // pred_check_branch
    %16 = sbr.rel (0) target = $region9
  $region8: #{resnet_block_forward.1} parent=0 // pred_region
    _
  $region9: #{resnet_block_forward.1} parent=0 // pred_fallthru
    _
  // Predicated region
  $region10: #{resnet_block_forward.1} parent=0 // pred_check
    _
  $region11: #{resnet_block_forward.1} parent=0 // pred_check_branch
    %18 = sbr.rel (0) target = $region13
  $region12: #{resnet_block_forward.1} parent=0 // pred_region
    _
  $region13: #{resnet_block_forward.1} parent=0 // pred_fallthru
    _
  // Predicated region
  $region14: #{resnet_block_forward.1} parent=0 // pred_check
    _
  $region15: #{resnet_block_forward.1} parent=0 // pred_check_branch
    %20 = sbr.rel (0) target = $region17
  $region16: #{resnet_block_forward.1} parent=0 // pred_region
    _
  $region17: #{resnet_block_forward.1} parent=0 // pred_fallthru
    _
  // Predicated region
  $region18: #{resnet_block_forward.1} parent=0 // pred_check
    _
  $region19: #{resnet_block_forward.1} parent=0 // pred_check_branch
    %22 = sbr.rel (0) target = $region21
  $region20: #{resnet_block_forward.1} parent=0 // pred_region
    _
  $region21: #{resnet_block_forward.1} parent=0 // pred_fallthru
    _
  // Predicated region
  $region22: #{resnet_block_forward.1} parent=0 // pred_check
    _
  $region23: #{resnet_block_forward.1} parent=0 // pred_check_branch
    %24 = sbr.rel (0) target = $region25
  $region24: #{resnet_block_forward.1} parent=0 // pred_region
    _
  $region25: #{resnet_block_forward.1} parent=0 // pred_fallthru
    _
  // Predicated region
  $region26: #{resnet_block_forward.1} parent=0 // pred_check
    _
  $region27: #{resnet_block_forward.1} parent=0 // pred_check_branch
    %26 = sbr.rel (0) target = $region29
  $region28: #{resnet_block_forward.1} parent=0 // pred_region
    _
  $region29: #{resnet_block_forward.1} parent=0 // pred_fallthru
    _
  // Predicated region
  $region30: #{resnet_block_forward.1} parent=0 // pred_check
    _
  $region31: #{resnet_block_forward.1} parent=0 // pred_check_branch
    %28 = sbr.rel (0) target = $region33
  $region32: #{resnet_block_forward.1} parent=0 // pred_region
    _
  $region33: #{resnet_block_forward.1} parent=0 // pred_fallthru
    _
  %v29 = vld [vmem:[%s7] sm:$0xff]
  %v30 = vld [vmem:[%s7 + $0x8] sm:$0xff]
  %v31 = vld [vmem:[%s7 + $0x10] sm:$0xff]
  %v32 = vld [vmem:[%s7 + $0x18] sm:$0xff]
  %v33 = vld [vmem:[%s7 + $0x20] sm:$0xff]
  %v34 = vld [vmem:[%s7 + $0x28] sm:$0xff]
  %v35 = vld [vmem:[%s7 + $0x30] sm:$0xff]
  %v36 = vld [vmem:[%s7 + $0x38] sm:$0xff]
  %v37 = vld [vmem:[%s7 + $0x40] sm:$0xff]
  %v38 = vld [vmem:[%s7 + $0x48] sm:$0xff]
  %v39 = vld [vmem:[%s7 + $0x50] sm:$0xff]
  %v40 = vld [vmem:[%s7 + $0x58] sm:$0xff]
  %v41 = vld [vmem:[%s7 + $0x60] sm:$0xff]
  %v42 = vld [vmem:[%s7 + $0x68] sm:$0xff]
  %v43 = vld [vmem:[%s7 + $0x70] sm:$0xff]
  %v44 = vld [vmem:[%s7 + $0x78] sm:$0xff]
  %v45 = vld [vmem:[%s0] sm:$0xff]
  %v46 = vld [vmem:[%s0 + $0x8] sm:$0xff]
  %v47 = vld [vmem:[%s3] sm:$0x1]
  %v48 = vld [vmem:[%s4] sm:$0x1]
  %49 = vst [vmem:[#allocation2] sm:$0xff] %v45
  %50 = vst [vmem:[#allocation2 + $0x10] sm:$0xff] %v46
  %v53 = vrot.slane %v45, 7
  %v54 = vrot.slane %v46, 7
  %55 = vrot.lane.b32.xlu0 %v53, 64
  %v56 = vpop.permute.xlu0 %55
  %57 = vrot.lane.b32.xlu0 %v54, 64
  %v58 = vpop.permute.xlu0 %57
  %vm61 = vcmask 523265
  %62 = vst.msk [vmem:[#allocation2 + $0x8] sm:$0xfe] %vm61, %v56
  %63 = vst.msk [vmem:[#allocation2 + $0x18] sm:$0xfe] %vm61, %v58
  %64 = vrot.lane.b32.xlu0 %v45, 64
  %v65 = vpop.permute.xlu0 %64
  %66 = vrot.lane.b32.xlu0 %v46, 64
  %v67 = vpop.permute.xlu0 %66
  %vm70 = vcmask 516096
  %71 = vst.msk [vmem:[#allocation2 + $0x8] sm:$0x1] %vm70, %v65
  %72 = vst.msk [vmem:[#allocation2 + $0x18] sm:$0x1] %vm70, %v67
  %v73 = vrot.slane %v45, 1
  %v74 = vrot.slane %v46, 1
  %75 = vrot.lane.b32.xlu0 %v73, 64
  %v76 = vpop.permute.xlu0 %75
  %77 = vrot.lane.b32.xlu0 %v74, 64
  %v78 = vpop.permute.xlu0 %77
  %vm81 = vcmask 1047040
  %82 = vst.msk [vmem:[#allocation2 + $0x8] sm:$0x7f] %vm81, %v76
  %83 = vst.msk [vmem:[#allocation2 + $0x18] sm:$0x7f] %vm81, %v78
  %vm84 = vcmask 1040896
  %85 = vst.msk [vmem:[#allocation2 + $0xf] sm:$0x1] %vm84, %v56
  %86 = vst.msk [vmem:[#allocation2 + $0x1f] sm:$0x1] %vm84, %v58
  %v87 = vld [vmem:[#allocation2] sm:$0xff]
  %v88 = vld [vmem:[#allocation2 + $0x8] sm:$0xff]
  %v89 = vld [vmem:[#allocation2 + $0x10] sm:$0xff]
  %v90 = vld [vmem:[#allocation2 + $0x18] sm:$0xff]
  %v91 = vld [vmem:[%s1] sm:$0xff]
  %v92 = vld [vmem:[%s1 + $0x8] sm:$0xff]
  %v93 = vld [vmem:[%s1 + $0x10] sm:$0xff]
  %v94 = vld [vmem:[%s1 + $0x18] sm:$0xff]
  %v95 = vld [vmem:[%s1 + $0x20] sm:$0xff]
  %v96 = vld [vmem:[%s1 + $0x28] sm:$0xff]
  %v97 = vld [vmem:[%s1 + $0x30] sm:$0xff]
  %v98 = vld [vmem:[%s1 + $0x38] sm:$0xff]
  %v99 = vld [vmem:[%s1 + $0x40] sm:$0xff]
  %v100 = vld [vmem:[%s1 + $0x48] sm:$0xff]
  %v101 = vld [vmem:[%s1 + $0x50] sm:$0xff]
  %v102 = vld [vmem:[%s1 + $0x58] sm:$0xff]
  %v103 = vld [vmem:[%s1 + $0x60] sm:$0xff]
  %v104 = vld [vmem:[%s1 + $0x68] sm:$0xff]
  %v105 = vld [vmem:[%s1 + $0x70] sm:$0xff]
  %v106 = vld [vmem:[%s1 + $0x78] sm:$0xff]
  %v107 = vld [vmem:[%s1 + $0x80] sm:$0xff]
  %v108 = vld [vmem:[%s1 + $0x88] sm:$0xff]
  %v109 = vld [vmem:[%s1 + $0x90] sm:$0xff]
  %v110 = vld [vmem:[%s1 + $0x98] sm:$0xff]
  %v111 = vld [vmem:[%s1 + $0xa0] sm:$0xff]
  %v112 = vld [vmem:[%s1 + $0xa8] sm:$0xff]
  %v113 = vld [vmem:[%s1 + $0xb0] sm:$0xff]
  %v114 = vld [vmem:[%s1 + $0xb8] sm:$0xff]
  %v115 = vld [vmem:[%s1 + $0xc0] sm:$0xff]
  %v116 = vld [vmem:[%s1 + $0xc8] sm:$0xff]
  %v117 = vld [vmem:[%s1 + $0xd0] sm:$0xff]
  %v118 = vld [vmem:[%s1 + $0xd8] sm:$0xff]
  %v119 = vld [vmem:[%s1 + $0xe0] sm:$0xff]
  %v120 = vld [vmem:[%s1 + $0xe8] sm:$0xff]
  %v121 = vld [vmem:[%s1 + $0xf0] sm:$0xff]
  %v122 = vld [vmem:[%s1 + $0xf8] sm:$0xff]
  %123 = vmatprep.subr.mxu0 0.0
  %124 = vmatpush1.msra.mxu0 %v106
  %125 = vmatprep.subr.mxu0 0.0
  %126 = vmatpush1.msra.mxu0 %v105
  %127 = vmatprep.subr.mxu0 0.0
  %128 = vmatpush1.msra.mxu0 %v104
  %129 = vmatprep.subr.mxu0 0.0
  %130 = vmatpush1.msra.mxu0 %v103
  %131 = vmatprep.subr.mxu0 0.0
  %132 = vmatpush1.msra.mxu0 %v102
  %133 = vmatprep.subr.mxu0 0.0
  %134 = vmatpush1.msra.mxu0 %v101
  %135 = vmatprep.subr.mxu0 0.0
  %136 = vmatpush1.msra.mxu0 %v100
  %137 = vmatprep.subr.mxu0 0.0
  %138 = vmatpush1.msra.mxu0 %v99
  %139 = vmatprep.subr.mxu0 0.0
  %140 = vmatpush1.msra.mxu0 %v98
  %141 = vmatprep.subr.mxu0 0.0
  %142 = vmatpush1.msra.mxu0 %v97
  %143 = vmatprep.subr.mxu0 0.0
  %144 = vmatpush1.msra.mxu0 %v96
  %145 = vmatprep.subr.mxu0 0.0
  %146 = vmatpush1.msra.mxu0 %v95
  %147 = vmatprep.subr.mxu0 0.0
  %148 = vmatpush1.msra.mxu0 %v94
  %149 = vmatprep.subr.mxu0 0.0
  %150 = vmatpush1.msra.mxu0 %v93
  %151 = vmatprep.subr.mxu0 0.0
  %152 = vmatpush1.msra.mxu0 %v92
  %153 = vmatprep.subr.mxu0 0.0
  %154 = vmatpush1.msra.mxu0 %v91
  %155 = vmatprep.subr.mxu0 0.0
  %156 = vmatpush2.msra.mxu0 %v122
  %157 = vmatprep.subr.mxu0 0.0
  %158 = vmatpush2.msra.mxu0 %v121
  %159 = vmatprep.subr.mxu0 0.0
  %160 = vmatpush2.msra.mxu0 %v120
  %161 = vmatprep.subr.mxu0 0.0
  %162 = vmatpush2.msra.mxu0 %v119
  %163 = vmatprep.subr.mxu0 0.0
  %164 = vmatpush2.msra.mxu0 %v118
  %165 = vmatprep.subr.mxu0 0.0
  %166 = vmatpush2.msra.mxu0 %v117
  %167 = vmatprep.subr.mxu0 0.0
  %168 = vmatpush2.msra.mxu0 %v116
  %169 = vmatprep.subr.mxu0 0.0
  %170 = vmatpush2.msra.mxu0 %v115
  %171 = vmatprep.subr.mxu0 0.0
  %172 = vmatpush2.msra.mxu0 %v114
  %173 = vmatprep.subr.mxu0 0.0
  %174 = vmatpush2.msra.mxu0 %v113
  %175 = vmatprep.subr.mxu0 0.0
  %176 = vmatpush2.msra.mxu0 %v112
  %177 = vmatprep.subr.mxu0 0.0
  %178 = vmatpush2.msra.mxu0 %v111
  %179 = vmatprep.subr.mxu0 0.0
  %180 = vmatpush2.msra.mxu0 %v110
  %181 = vmatprep.subr.mxu0 0.0
  %182 = vmatpush2.msra.mxu0 %v109
  %183 = vmatprep.subr.mxu0 0.0
  %184 = vmatpush2.msra.mxu0 %v108
  %185 = vmatprep.subr.mxu0 0.0
  %186 = vmatpush2.msra.mxu0 %v107
  %187 = vmatprep.mubr.f32.mxu0 %v88
  %188 = vmatmul.mubr.f32.gmra.mxu0 %v87
  %v189 = vpop.f32.mrf.mxu0
  %v190 = vadd.f32 0.0, %v189
  %v191 = vpop.f32.mrf.mxu0
  %192 = vmatprep.mubr.f32.mxu0 %v90
  %193 = vmatmul.mubr.f32.gmra.mxu0 %v89
  %v194 = vpop.f32.mrf.mxu0
  %v195 = vadd.f32 0.0, %v194
  %v196 = vpop.f32.mrf.mxu0
  %197 = vdwg.mxu0
  %v198 = vadd.f32 %v190, %v195
  %v199 = vrot.slane %v198, 4
  %v200 = vadd.f32 %v198, %v199
  %v201 = vrot.slane %v200, 2
  %v202 = vadd.f32 %v200, %v201
  %v203 = vrot.slane %v202, 1
  %v204 = vadd.f32 %v202, %v203
  %v205 = vmul.f32 %v190, %v190
  %v206 = vmul.f32 %v195, %v195
  %v207 = vadd.f32 %v205, %v206
  %v208 = vrot.slane %v207, 4
  %v209 = vadd.f32 %v207, %v208
  %v210 = vrot.slane %v209, 2
  %v211 = vadd.f32 %v209, %v210
  %v212 = vrot.slane %v211, 1
  %v213 = vadd.f32 %v211, %v212
  %vm214 = vcmask 1040384
  %v215 = vsel %vm214, %v204, %v213
  %216 = vmatprep.subr.mxu0 0.0
  %217 = vmatpush1.msra.mxu0 %v44
  %218 = vmatprep.subr.mxu0 0.0
  %219 = vmatpush1.msra.mxu0 %v43
  %220 = vmatprep.subr.mxu0 0.0
  %221 = vmatpush1.msra.mxu0 %v42
  %222 = vmatprep.subr.mxu0 0.0
  %223 = vmatpush1.msra.mxu0 %v41
  %224 = vmatprep.subr.mxu0 0.0
  %225 = vmatpush1.msra.mxu0 %v40
  %226 = vmatprep.subr.mxu0 0.0
  %227 = vmatpush1.msra.mxu0 %v39
  %228 = vmatprep.subr.mxu0 0.0
  %229 = vmatpush1.msra.mxu0 %v38
  %230 = vmatprep.subr.mxu0 0.0
  %231 = vmatpush1.msra.mxu0 %v37
  %232 = vmatprep.subr.mxu0 0.0
  %233 = vmatpush1.msra.mxu0 %v36
  %234 = vmatprep.subr.mxu0 0.0
  %235 = vmatpush1.msra.mxu0 %v35
  %236 = vmatprep.subr.mxu0 0.0
  %237 = vmatpush1.msra.mxu0 %v34
  %238 = vmatprep.subr.mxu0 0.0
  %239 = vmatpush1.msra.mxu0 %v33
  %240 = vmatprep.subr.mxu0 0.0
  %241 = vmatpush1.msra.mxu0 %v32
  %242 = vmatprep.subr.mxu0 0.0
  %243 = vmatpush1.msra.mxu0 %v31
  %244 = vmatprep.subr.mxu0 0.0
  %245 = vmatpush1.msra.mxu0 %v30
  %246 = vmatprep.subr.mxu0 0.0
  %247 = vmatpush1.msra.mxu0 %v29
  %248 = vmatprep.subr.mxu0 0.0
  %249 = vmatpush2.msra.mxu0 0.0
  %250 = vmatprep.subr.mxu0 0.0
  %251 = vmatpush2.msra.mxu0 0.0
  %252 = vmatprep.subr.mxu0 0.0
  %253 = vmatpush2.msra.mxu0 0.0
  %254 = vmatprep.subr.mxu0 0.0
  %255 = vmatpush2.msra.mxu0 0.0
  %256 = vmatprep.subr.mxu0 0.0
  %257 = vmatpush2.msra.mxu0 0.0
  %258 = vmatprep.subr.mxu0 0.0
  %259 = vmatpush2.msra.mxu0 0.0
  %260 = vmatprep.subr.mxu0 0.0
  %261 = vmatpush2.msra.mxu0 0.0
  %262 = vmatprep.subr.mxu0 0.0
  %263 = vmatpush2.msra.mxu0 0.0
  %264 = vmatprep.subr.mxu0 0.0
  %265 = vmatpush2.msra.mxu0 0.0
  %266 = vmatprep.subr.mxu0 0.0
  %267 = vmatpush2.msra.mxu0 0.0
  %268 = vmatprep.subr.mxu0 0.0
  %269 = vmatpush2.msra.mxu0 0.0
  %270 = vmatprep.subr.mxu0 0.0
  %271 = vmatpush2.msra.mxu0 0.0
  %272 = vmatprep.subr.mxu0 0.0
  %273 = vmatpush2.msra.mxu0 0.0
  %274 = vmatprep.subr.mxu0 0.0
  %275 = vmatpush2.msra.mxu0 0.0
  %276 = vmatprep.subr.mxu0 0.0
  %277 = vmatpush2.msra.mxu0 0.0
  %278 = vmatprep.subr.mxu0 0.0
  %279 = vmatpush2.msra.mxu0 0.0
  %280 = vmatprep.mubr.f32.mxu0 0.0
  %281 = vmatmul.mubr.f32.gmra.mxu0 %v215
  %v282 = vpop.f32.mrf.mxu0
  %v283 = vadd.f32 0.0, %v282
  %v284 = vpop.f32.mrf.mxu0
  %285 = vdwg.mxu0
  %v286 = vmul.f32 %v283, 0.001953125
  %v287 = vmul.f32 %v286, %v286
  %v289 = vrot.slane %v287, 7
  %v291 = vsub.f32 %v286, %v289
  %v292 = vadd.f32 %v291, 1e-05
  %v293 = vrsqrt.pop %v292
  %v296 = vunpack.c.l.s4 1966171168
  %v297 = vunpack.c.0.s8 %v296
  %v298 = vlaneseq
  %v299 = vshrl.u32 %v298, 7
  %v300 = vsub.s32 %v297, %v299
  %v301 = vrot.slane %v293, %v300
  %v302 = vcombine.high %v301, %v301
  %v304 = vunpack.c.l.s4 1966171168
  %v305 = vunpack.c.0.s8 %v304
  %v306 = vlaneseq
  %v307 = vshrl.u32 %v306, 7
  %v308 = vsub.s32 %v305, %v307
  %v309 = vrot.slane %v302, %v308
  %v311 = vmul.f32 %v47, %v309
  %v312 = vmul.f32 %v286, %v311
  %v313 = vsub.f32 %v48, %v312
  %v315 = vlaneseq
  %v316 = vshrl.u32 %v315, 7
  %v317 = vsub.s32 0, %v316
  %v318 = vrot.slane %v311, %v317
  %v320 = vmul.f32 %v190, %v318
  %v321 = vmul.f32 %v195, %v318
  %v323 = vlaneseq
  %v324 = vshrl.u32 %v323, 7
  %v325 = vsub.s32 0, %v324
  %v326 = vrot.slane %v313, %v325
  %v328 = vadd.f32 %v320, %v326
  %v329 = vadd.f32 %v321, %v326
  %v330 = vmax.f32 %v328, 0.0
  %v331 = vmax.f32 %v329, 0.0
  %v332 = vld [vmem:[%s5] sm:$0x1]
  %v333 = vld [vmem:[%s6] sm:$0x1]
  %334 = vst [vmem:[#allocation2] sm:$0xff] %v330
  %335 = vst [vmem:[#allocation2 + $0x10] sm:$0xff] %v331
  %v338 = vrot.slane %v330, 7
  %v339 = vrot.slane %v331, 7
  %340 = vrot.lane.b32.xlu0 %v338, 64
  %v341 = vpop.permute.xlu0 %340
  %342 = vrot.lane.b32.xlu0 %v339, 64
  %v343 = vpop.permute.xlu0 %342
  %346 = vst.msk [vmem:[#allocation2 + $0x8] sm:$0xfe] %vm61, %v341
  %347 = vst.msk [vmem:[#allocation2 + $0x18] sm:$0xfe] %vm61, %v343
  %348 = vrot.lane.b32.xlu0 %v330, 64
  %v349 = vpop.permute.xlu0 %348
  %350 = vrot.lane.b32.xlu0 %v331, 64
  %v351 = vpop.permute.xlu0 %350
  %354 = vst.msk [vmem:[#allocation2 + $0x8] sm:$0x1] %vm70, %v349
  %355 = vst.msk [vmem:[#allocation2 + $0x18] sm:$0x1] %vm70, %v351
  %v356 = vrot.slane %v330, 1
  %v357 = vrot.slane %v331, 1
  %358 = vrot.lane.b32.xlu0 %v356, 64
  %v359 = vpop.permute.xlu0 %358
  %360 = vrot.lane.b32.xlu0 %v357, 64
  %v361 = vpop.permute.xlu0 %360
  %364 = vst.msk [vmem:[#allocation2 + $0x8] sm:$0x7f] %vm81, %v359
  %365 = vst.msk [vmem:[#allocation2 + $0x18] sm:$0x7f] %vm81, %v361
  %366 = vst.msk [vmem:[#allocation2 + $0xf] sm:$0x1] %vm84, %v341
  %367 = vst.msk [vmem:[#allocation2 + $0x1f] sm:$0x1] %vm84, %v343
  %v368 = vld [vmem:[#allocation2] sm:$0xff]
  %v369 = vld [vmem:[#allocation2 + $0x8] sm:$0xff]
  %v370 = vld [vmem:[#allocation2 + $0x10] sm:$0xff]
  %v371 = vld [vmem:[#allocation2 + $0x18] sm:$0xff]
  %v372 = vld [vmem:[%s2] sm:$0xff]
  %v373 = vld [vmem:[%s2 + $0x8] sm:$0xff]
  %v374 = vld [vmem:[%s2 + $0x10] sm:$0xff]
  %v375 = vld [vmem:[%s2 + $0x18] sm:$0xff]
  %v376 = vld [vmem:[%s2 + $0x20] sm:$0xff]
  %v377 = vld [vmem:[%s2 + $0x28] sm:$0xff]
  %v378 = vld [vmem:[%s2 + $0x30] sm:$0xff]
  %v379 = vld [vmem:[%s2 + $0x38] sm:$0xff]
  %v380 = vld [vmem:[%s2 + $0x40] sm:$0xff]
  %v381 = vld [vmem:[%s2 + $0x48] sm:$0xff]
  %v382 = vld [vmem:[%s2 + $0x50] sm:$0xff]
  %v383 = vld [vmem:[%s2 + $0x58] sm:$0xff]
  %v384 = vld [vmem:[%s2 + $0x60] sm:$0xff]
  %v385 = vld [vmem:[%s2 + $0x68] sm:$0xff]
  %v386 = vld [vmem:[%s2 + $0x70] sm:$0xff]
  %v387 = vld [vmem:[%s2 + $0x78] sm:$0xff]
  %v388 = vld [vmem:[%s2 + $0x80] sm:$0xff]
  %v389 = vld [vmem:[%s2 + $0x88] sm:$0xff]
  %v390 = vld [vmem:[%s2 + $0x90] sm:$0xff]
  %v391 = vld [vmem:[%s2 + $0x98] sm:$0xff]
  %v392 = vld [vmem:[%s2 + $0xa0] sm:$0xff]
  %v393 = vld [vmem:[%s2 + $0xa8] sm:$0xff]
  %v394 = vld [vmem:[%s2 + $0xb0] sm:$0xff]
  %v395 = vld [vmem:[%s2 + $0xb8] sm:$0xff]
  %v396 = vld [vmem:[%s2 + $0xc0] sm:$0xff]
  %v397 = vld [vmem:[%s2 + $0xc8] sm:$0xff]
  %v398 = vld [vmem:[%s2 + $0xd0] sm:$0xff]
  %v399 = vld [vmem:[%s2 + $0xd8] sm:$0xff]
  %v400 = vld [vmem:[%s2 + $0xe0] sm:$0xff]
  %v401 = vld [vmem:[%s2 + $0xe8] sm:$0xff]
  %v402 = vld [vmem:[%s2 + $0xf0] sm:$0xff]
  %v403 = vld [vmem:[%s2 + $0xf8] sm:$0xff]
  %404 = vmatprep.subr.mxu0 0.0
  %405 = vmatpush1.msra.mxu0 %v387
  %406 = vmatprep.subr.mxu0 0.0
  %407 = vmatpush1.msra.mxu0 %v386
  %408 = vmatprep.subr.mxu0 0.0
  %409 = vmatpush1.msra.mxu0 %v385
  %410 = vmatprep.subr.mxu0 0.0
  %411 = vmatpush1.msra.mxu0 %v384
  %412 = vmatprep.subr.mxu0 0.0
  %413 = vmatpush1.msra.mxu0 %v383
  %414 = vmatprep.subr.mxu0 0.0
  %415 = vmatpush1.msra.mxu0 %v382
  %416 = vmatprep.subr.mxu0 0.0
  %417 = vmatpush1.msra.mxu0 %v381
  %418 = vmatprep.subr.mxu0 0.0
  %419 = vmatpush1.msra.mxu0 %v380
  %420 = vmatprep.subr.mxu0 0.0
  %421 = vmatpush1.msra.mxu0 %v379
  %422 = vmatprep.subr.mxu0 0.0
  %423 = vmatpush1.msra.mxu0 %v378
  %424 = vmatprep.subr.mxu0 0.0
  %425 = vmatpush1.msra.mxu0 %v377
  %426 = vmatprep.subr.mxu0 0.0
  %427 = vmatpush1.msra.mxu0 %v376
  %428 = vmatprep.subr.mxu0 0.0
  %429 = vmatpush1.msra.mxu0 %v375
  %430 = vmatprep.subr.mxu0 0.0
  %431 = vmatpush1.msra.mxu0 %v374
  %432 = vmatprep.subr.mxu0 0.0
  %433 = vmatpush1.msra.mxu0 %v373
  %434 = vmatprep.subr.mxu0 0.0
  %435 = vmatpush1.msra.mxu0 %v372
  %436 = vmatprep.subr.mxu0 0.0
  %437 = vmatpush2.msra.mxu0 %v403
  %438 = vmatprep.subr.mxu0 0.0
  %439 = vmatpush2.msra.mxu0 %v402
  %440 = vmatprep.subr.mxu0 0.0
  %441 = vmatpush2.msra.mxu0 %v401
  %442 = vmatprep.subr.mxu0 0.0
  %443 = vmatpush2.msra.mxu0 %v400
  %444 = vmatprep.subr.mxu0 0.0
  %445 = vmatpush2.msra.mxu0 %v399
  %446 = vmatprep.subr.mxu0 0.0
  %447 = vmatpush2.msra.mxu0 %v398
  %448 = vmatprep.subr.mxu0 0.0
  %449 = vmatpush2.msra.mxu0 %v397
  %450 = vmatprep.subr.mxu0 0.0
  %451 = vmatpush2.msra.mxu0 %v396
  %452 = vmatprep.subr.mxu0 0.0
  %453 = vmatpush2.msra.mxu0 %v395
  %454 = vmatprep.subr.mxu0 0.0
  %455 = vmatpush2.msra.mxu0 %v394
  %456 = vmatprep.subr.mxu0 0.0
  %457 = vmatpush2.msra.mxu0 %v393
  %458 = vmatprep.subr.mxu0 0.0
  %459 = vmatpush2.msra.mxu0 %v392
  %460 = vmatprep.subr.mxu0 0.0
  %461 = vmatpush2.msra.mxu0 %v391
  %462 = vmatprep.subr.mxu0 0.0
  %463 = vmatpush2.msra.mxu0 %v390
  %464 = vmatprep.subr.mxu0 0.0
  %465 = vmatpush2.msra.mxu0 %v389
  %466 = vmatprep.subr.mxu0 0.0
  %467 = vmatpush2.msra.mxu0 %v388
  %468 = vmatprep.mubr.f32.mxu0 %v369
  %469 = vmatmul.mubr.f32.gmra.mxu0 %v368
  %v470 = vpop.f32.mrf.mxu0
  %v471 = vadd.f32 0.0, %v470
  %v472 = vpop.f32.mrf.mxu0
  %473 = vmatprep.mubr.f32.mxu0 %v371
  %474 = vmatmul.mubr.f32.gmra.mxu0 %v370
  %v475 = vpop.f32.mrf.mxu0
  %v476 = vadd.f32 0.0, %v475
  %v477 = vpop.f32.mrf.mxu0
  %478 = vdwg.mxu0
  %v479 = vadd.f32 %v471, %v476
  %v480 = vrot.slane %v479, 4
  %v481 = vadd.f32 %v479, %v480
  %v482 = vrot.slane %v481, 2
  %v483 = vadd.f32 %v481, %v482
  %v484 = vrot.slane %v483, 1
  %v485 = vadd.f32 %v483, %v484
  %v486 = vmul.f32 %v471, %v471
  %v487 = vmul.f32 %v476, %v476
  %v488 = vadd.f32 %v486, %v487
  %v489 = vrot.slane %v488, 4
  %v490 = vadd.f32 %v488, %v489
  %v491 = vrot.slane %v490, 2
  %v492 = vadd.f32 %v490, %v491
  %v493 = vrot.slane %v492, 1
  %v494 = vadd.f32 %v492, %v493
  %v495 = vsel %vm214, %v485, %v494
  %496 = vmatprep.subr.mxu0 0.0
  %497 = vmatpush1.msra.mxu0 %v44
  %498 = vmatprep.subr.mxu0 0.0
  %499 = vmatpush1.msra.mxu0 %v43
  %500 = vmatprep.subr.mxu0 0.0
  %501 = vmatpush1.msra.mxu0 %v42
  %502 = vmatprep.subr.mxu0 0.0
  %503 = vmatpush1.msra.mxu0 %v41
  %504 = vmatprep.subr.mxu0 0.0
  %505 = vmatpush1.msra.mxu0 %v40
  %506 = vmatprep.subr.mxu0 0.0
  %507 = vmatpush1.msra.mxu0 %v39
  %508 = vmatprep.subr.mxu0 0.0
  %509 = vmatpush1.msra.mxu0 %v38
  %510 = vmatprep.subr.mxu0 0.0
  %511 = vmatpush1.msra.mxu0 %v37
  %512 = vmatprep.subr.mxu0 0.0
  %513 = vmatpush1.msra.mxu0 %v36
  %514 = vmatprep.subr.mxu0 0.0
  %515 = vmatpush1.msra.mxu0 %v35
  %516 = vmatprep.subr.mxu0 0.0
  %517 = vmatpush1.msra.mxu0 %v34
  %518 = vmatprep.subr.mxu0 0.0
  %519 = vmatpush1.msra.mxu0 %v33
  %520 = vmatprep.subr.mxu0 0.0
  %521 = vmatpush1.msra.mxu0 %v32
  %522 = vmatprep.subr.mxu0 0.0
  %523 = vmatpush1.msra.mxu0 %v31
  %524 = vmatprep.subr.mxu0 0.0
  %525 = vmatpush1.msra.mxu0 %v30
  %526 = vmatprep.subr.mxu0 0.0
  %527 = vmatpush1.msra.mxu0 %v29
  %528 = vmatprep.subr.mxu0 0.0
  %529 = vmatpush2.msra.mxu0 0.0
  %530 = vmatprep.subr.mxu0 0.0
  %531 = vmatpush2.msra.mxu0 0.0
  %532 = vmatprep.subr.mxu0 0.0
  %533 = vmatpush2.msra.mxu0 0.0
  %534 = vmatprep.subr.mxu0 0.0
  %535 = vmatpush2.msra.mxu0 0.0
  %536 = vmatprep.subr.mxu0 0.0
  %537 = vmatpush2.msra.mxu0 0.0
  %538 = vmatprep.subr.mxu0 0.0
  %539 = vmatpush2.msra.mxu0 0.0
  %540 = vmatprep.subr.mxu0 0.0
  %541 = vmatpush2.msra.mxu0 0.0
  %542 = vmatprep.subr.mxu0 0.0
  %543 = vmatpush2.msra.mxu0 0.0
  %544 = vmatprep.subr.mxu0 0.0
  %545 = vmatpush2.msra.mxu0 0.0
  %546 = vmatprep.subr.mxu0 0.0
  %547 = vmatpush2.msra.mxu0 0.0
  %548 = vmatprep.subr.mxu0 0.0
  %549 = vmatpush2.msra.mxu0 0.0
  %550 = vmatprep.subr.mxu0 0.0
  %551 = vmatpush2.msra.mxu0 0.0
  %552 = vmatprep.subr.mxu0 0.0
  %553 = vmatpush2.msra.mxu0 0.0
  %554 = vmatprep.subr.mxu0 0.0
  %555 = vmatpush2.msra.mxu0 0.0
  %556 = vmatprep.subr.mxu0 0.0
  %557 = vmatpush2.msra.mxu0 0.0
  %558 = vmatprep.subr.mxu0 0.0
  %559 = vmatpush2.msra.mxu0 0.0
  %560 = vmatprep.mubr.f32.mxu0 0.0
  %561 = vmatmul.mubr.f32.gmra.mxu0 %v495
  %v562 = vpop.f32.mrf.mxu0
  %v563 = vadd.f32 0.0, %v562
  %v564 = vpop.f32.mrf.mxu0
  %565 = vdwg.mxu0
  %v566 = vmul.f32 %v563, 0.001953125
  %v567 = vmul.f32 %v566, %v566
  %v569 = vrot.slane %v567, 7
  %v571 = vsub.f32 %v566, %v569
  %v572 = vadd.f32 %v571, 1e-05
  %v573 = vrsqrt.pop %v572
  %v576 = vunpack.c.l.s4 1966171168
  %v577 = vunpack.c.0.s8 %v576
  %v578 = vlaneseq
  %v579 = vshrl.u32 %v578, 7
  %v580 = vsub.s32 %v577, %v579
  %v581 = vrot.slane %v573, %v580
  %v582 = vcombine.high %v581, %v581
  %v584 = vunpack.c.l.s4 1966171168
  %v585 = vunpack.c.0.s8 %v584
  %v586 = vlaneseq
  %v587 = vshrl.u32 %v586, 7
  %v588 = vsub.s32 %v585, %v587
  %v589 = vrot.slane %v582, %v588
  %v591 = vmul.f32 %v332, %v589
  %v592 = vmul.f32 %v566, %v591
  %v593 = vsub.f32 %v333, %v592
  %v595 = vlaneseq
  %v596 = vshrl.u32 %v595, 7
  %v597 = vsub.s32 0, %v596
  %v598 = vrot.slane %v591, %v597
  %v600 = vmul.f32 %v471, %v598
  %v601 = vmul.f32 %v476, %v598
  %v603 = vlaneseq
  %v604 = vshrl.u32 %v603, 7
  %v605 = vsub.s32 0, %v604
  %v606 = vrot.slane %v593, %v605
  %v608 = vadd.f32 %v600, %v606
  %v609 = vadd.f32 %v601, %v606
  %v610 = vmax.f32 %v608, 0.0
  %v611 = vmax.f32 %v609, 0.0
  %v612 = vadd.f32 %v45, %v610
  %v613 = vadd.f32 %v46, %v611
  %614 = vst [vmem:[%s8] sm:$0xff] %v612
  %615 = vst [vmem:[%s8 + $0x8] sm:$0xff] %v613
  // Predicated region
  $region34: #{resnet_block_forward.1} parent=0 // pred_check
    _
  $region35: #{resnet_block_forward.1} parent=0 // pred_check_branch
    %617 = sbr.rel (0) target = $region37
  $region36: #{resnet_block_forward.1} parent=0 // pred_region
    _
  $region37: #{resnet_block_forward.1} parent=0 // pred_fallthru
    _
  // Predicated region
  $region38: #{resnet_block_forward.1} parent=0 // pred_check
    _
  $region39: #{resnet_block_forward.1} parent=0 // pred_check_branch
    %619 = sbr.rel (0) target = $region41
  $region40: #{resnet_block_forward.1} parent=0 // pred_region
    _
  $region41: #{resnet_block_forward.1} parent=0 // pred_fallthru
    _

</llo_original>
